<compile_context>
chip_gen: v7x
topology: tpu7x:2x2x1
jax: 0.10.0
libtpu: 0.0.40
codegen_flags: <defaults>
</compile_context>

<pallas_src>
import functools

import jax
import jax.numpy as jnp
from jax import lax
from jax.experimental import pallas as pl
from jax.experimental.pallas import tpu as pltpu

BN_EPS = 1e-4


def _fused_conv_bn_sigmoid_kernel(p_ref, w_ref, prm_ref, o_ref, *, m_total, tile_m):
    """One grid step = one (K, TM) patch tile.

    p_ref:   (K, TM)       im2col patches, transposed (lane axis = flattened spatial)
    w_ref:   (Cout, K)     conv weight
    prm_ref: (Cout, 3)     packed per-channel [gamma, beta, prune_filter]
    o_ref:   (Cout, M_pad) VMEM-resident across the whole grid; holds the raw conv
                           output until the last step, then the final activations.
    """
    i = pl.program_id(0)

    # Conv tile on the MXU (f32 accumulation), stored into the resident block.
    y = jnp.dot(w_ref[...], p_ref[...], preferred_element_type=jnp.float32)
    off = pl.multiple_of(i * tile_m, 128)
    o_ref[:, pl.ds(off, tile_m)] = y

    # Finalize: BN stats + affine + sigmoid + prune gate, in place over o_ref.
    @pl.when(i == pl.num_programs(0) - 1)
    def _finalize():
        z = o_ref[...]                                        # (Cout, M_pad) f32
        m = jnp.float32(m_total)
        n_pad = jnp.float32(z.shape[1] - m_total)
        # Padded columns are exactly zero (no conv bias) -> unmasked sum is exact.
        mean = jnp.sum(z, axis=1, keepdims=True) / m          # (Cout, 1)
        centered = z - mean
        ssq = jnp.sum(centered * centered, axis=1, keepdims=True)
        # Each padded column contributed (0 - mean)^2; subtract it back out.
        var = (ssq - n_pad * mean * mean) / m                 # biased batch variance
        gamma = prm_ref[:, 0:1]
        beta = prm_ref[:, 1:2]
        gate = jax.nn.sigmoid(prm_ref[:, 2:3])                # sigmoid(prune_filter)
        scale = gamma * lax.rsqrt(var + BN_EPS)
        shift = beta - mean * scale
        o_ref[...] = jax.nn.sigmoid(z * scale + shift) * gate


def _pick_tile_m(K, M, itemsize, *, budget_bytes=8 << 20, tm_cap=16384):
    """Largest lane tile (multiple of 128) whose double-buffered patch-tile
    footprint fits `budget_bytes`, capped at `tm_cap` and at ceil(M/2) so the
    grid keeps >= 2 steps (DMA pipelining / both v7x cores have work)."""
    tm = budget_bytes // (2 * K * itemsize)
    tm = max(128, (tm // 128) * 128)
    tm = min(tm, tm_cap)
    m128 = ((M + 127) // 128) * 128
    if m128 >= 256:
        tm = min(tm, ((m128 // 2 + 127) // 128) * 128)
    return int(min(tm, m128))


def encoding_unit_forward(x, conv_w, conv_b, bn_gamma, bn_beta, prune_filter,
                          *, stride, padding, tile_m=None,
                          matmul_dtype=jnp.bfloat16):
    """x: (N, Cin, H, W) f32, conv_w: (Cout, Cin, KH, KW). Returns (y_NCHW, prune_filter).

    `matmul_dtype=jnp.bfloat16` (default) halves patch HBM traffic and doubles the
    MXU rate; accumulation and the BN/sigmoid epilogue stay f32 (v5e has no bf16
    VPU/EUP).  `conv_b` is accepted but unused: under training-mode BatchNorm the
    bias is exactly cancelled by the mean subtraction.
    """
    del conv_b  # (y + b) - mean(y + b) == y - mean(y)

    N, Cin, H, W = x.shape
    Cout, _, KH, KW = conv_w.shape
    OH = (H + 2 * padding - KH) // stride + 1
    OW = (W + 2 * padding - KW) // stride + 1
    M = N * OH * OW
    K = Cin * KH * KW
    itemsize = jnp.dtype(matmul_dtype).itemsize

    TM = tile_m if tile_m is not None else _pick_tile_m(K, M, itemsize)
    assert TM % 128 == 0, "tile_m must be a multiple of 128 (lane width)"
    M_pad = ((M + TM - 1) // TM) * TM
    num_tiles = M_pad // TM

    # The whole conv output stays resident in VMEM; guard the footprint (the
    # finalize sweep keeps a few (Cout, M_pad) f32 temporaries live as well).
    resident_bytes = Cout * M_pad * 4
    pipeline_bytes = 2 * K * TM * itemsize + 2 * Cout * K * itemsize + 1024
    assert 6 * resident_bytes + 2 * pipeline_bytes <= (30 << 20), (
        "TODO(synk): very large M needs a two-pass tiled-epilogue fallback")
    vmem_limit = 32 << 20

    # --- wrapper glue: im2col in transposed (K, M) layout, cast to bf16 early ---
    # TODO(synk): replace with an in-kernel implicit conv (manual row-band DMA of
    # the padded input) to remove the 4x im2col HBM amplification.
    xb = x.astype(matmul_dtype)
    xp = jnp.pad(xb, ((0, 0), (0, 0), (padding, padding), (padding, padding)))
    cols = [xp[:, :, kh:kh + stride * OH:stride, kw:kw + stride * OW:stride]
            for kh in range(KH) for kw in range(KW)]
    patches = jnp.stack(cols, axis=0)                      # (KH*KW, N, Cin, OH, OW)
    patches = patches.transpose(2, 0, 1, 3, 4).reshape(K, M)
    patches = jnp.pad(patches, ((0, 0), (0, M_pad - M)))   # padded columns are zeros
    w2 = conv_w.reshape(Cout, K).astype(matmul_dtype)

    # One tiny packed per-channel parameter block: [gamma, beta, prune_filter].
    prm = jnp.stack([bn_gamma, bn_beta, prune_filter.reshape(-1)],
                    axis=1).astype(jnp.float32)            # (Cout, 3)

    out_pad = pl.pallas_call(
        functools.partial(_fused_conv_bn_sigmoid_kernel, m_total=M, tile_m=TM),
        out_shape=jax.ShapeDtypeStruct((Cout, M_pad), jnp.float32),
        grid=(num_tiles,),
        in_specs=[
            pl.BlockSpec((K, TM), lambda i: (0, i)),
            pl.BlockSpec((Cout, K), lambda i: (0, 0)),
            pl.BlockSpec((Cout, 3), lambda i: (0, 0)),
        ],
        out_specs=pl.BlockSpec((Cout, M_pad), lambda i: (0, 0)),
        compiler_params=pltpu.CompilerParams(
            dimension_semantics=("arbitrary",),
            vmem_limit_bytes=vmem_limit),
    )(patches, w2, prm)

    # TODO(synk): a channel-major (Cout, N, OH, OW) output could be consumed
    # directly downstream and skip this small transpose.
    y = out_pad[:, :M].reshape(Cout, N, OH, OW).transpose(1, 0, 2, 3)  # NCHW
    return y, prune_filter


def _reference_forward(x, conv_w, conv_b, bn_gamma, bn_beta, prune_filter,
                       *, stride, padding):
    # Pure-JAX reference for the self-check (training-mode BN, with conv bias).
    y = lax.conv_general_dilated(
        x, conv_w, (stride, stride), [(padding, padding), (padding, padding)],
        dimension_numbers=("NCHW", "OIHW", "NCHW"))
    y = y + conv_b.reshape(1, -1, 1, 1)
    mean = y.mean(axis=(0, 2, 3), keepdims=True)
    var = ((y - mean) ** 2).mean(axis=(0, 2, 3), keepdims=True)
    y = (y - mean) / jnp.sqrt(var + BN_EPS)
    y = y * bn_gamma.reshape(1, -1, 1, 1) + bn_beta.reshape(1, -1, 1, 1)
    y = jax.nn.sigmoid(y) * jax.nn.sigmoid(prune_filter.reshape(1, -1, 1, 1))
    return y


if __name__ == "__main__":
    # Module config (small):
    #   prevLayerProps['PrevLayerOutChannel'] = 4
    #   compressionProps = {'feature_compression_factor': 2,
    #                       'resolution_compression_factor': 2}
    prev_channels = 4
    feature_cf = 2
    res_cf = 2
    compressed_channels = prev_channels // feature_cf          # 2
    KH = KW = 2 + res_cf                                       # 4
    stride = res_cf                                            # 2
    padding = res_cf                                           # 2
    scaler = 15.0

    key = jax.random.PRNGKey(0)
    kx, kw, kb, kp = jax.random.split(key, 4)

    N, H, W = 2, 16, 16
    x = jax.random.normal(kx, (N, prev_channels, H, W), dtype=jnp.float32)

    # Deterministic parameter init (shapes match nn.Conv2d / nn.BatchNorm2d / prune_filter).
    fan_in = prev_channels * KH * KW
    bound = 1.0 / jnp.sqrt(fan_in)
    conv_w = jax.random.uniform(kw, (compressed_channels, prev_channels, KH, KW),
                                minval=-bound, maxval=bound, dtype=jnp.float32)
    conv_b = jax.random.uniform(kb, (compressed_channels,),
                                minval=-bound, maxval=bound, dtype=jnp.float32)
    bn_gamma = jnp.ones((compressed_channels,), dtype=jnp.float32)   # BN defaults
    bn_beta = jnp.zeros((compressed_channels,), dtype=jnp.float32)
    prune_filter = scaler * jax.random.uniform(kp, (1, compressed_channels, 1, 1),
                                               dtype=jnp.float32)

    # TODO(synk): BatchNorm running-stat updates (momentum=0.03) and prune_filter
    # requires_grad bookkeeping are training-state side effects, not part of the
    # functional forward.

    y_ref = _reference_forward(x, conv_w, conv_b, bn_gamma, bn_beta, prune_filter,
                               stride=stride, padding=padding)

    # Default path: bf16 patches on the MXU (f32 accumulate / f32 epilogue).
    # Auto tile pick gives TM=128 -> a 2-tile grid here (M = 2*9*9 = 162 -> 256),
    # exercising the resident-accumulate + finalize path.
    y_bf16, pf_out = encoding_unit_forward(x, conv_w, conv_b, bn_gamma, bn_beta,
                                           prune_filter, stride=stride,
                                           padding=padding)
    y_bf16 = jax.block_until_ready(y_bf16)
    assert y_bf16.shape == (N, compressed_channels, 9, 9), y_bf16.shape
    assert pf_out.shape == (1, compressed_channels, 1, 1)
    assert jnp.allclose(y_bf16, y_ref, atol=2e-2, rtol=2e-2), \
        float(jnp.abs(y_bf16 - y_ref).max())

    # f32 path: tight check against the reference.
    y_f32, _ = encoding_unit_forward(x, conv_w, conv_b, bn_gamma, bn_beta,
                                     prune_filter, stride=stride, padding=padding,
                                     matmul_dtype=jnp.float32)
    y_f32 = jax.block_until_ready(y_f32)
    assert jnp.allclose(y_f32, y_ref, atol=1e-4, rtol=1e-4), \
        float(jnp.abs(y_f32 - y_ref).max())

    print("KERNEL_OK")
</pallas_src>

<mosaic_0001>
module attributes {stable_mosaic.version = 11 : i64} {
  func.func @_fused_conv_bn_sigmoid_kernel(%arg0: i32, %arg1: memref<64x128xbf16, #tpu.memory_space<vmem>>, %arg2: memref<2x64xbf16, #tpu.memory_space<vmem>>, %arg3: memref<2x3xf32, #tpu.memory_space<vmem>>, %arg4: memref<2x256xf32, #tpu.memory_space<vmem>>) attributes {dimension_semantics = [#tpu.dimension_semantics<arbitrary>], iteration_bounds = array<i64: 2>, scalar_prefetch = 0 : i64, scratch_operands = 0 : i64, tpu.core_type = #tpu.core_type<tc>, window_params = [{transform_indices = @transform_0, window_bounds = array<i64: 64, 128>}, {pipeline_mode = #tpu.pipeline_mode<synchronous>, transform_indices = @transform_1, window_bounds = array<i64: 2, 64>}, {pipeline_mode = #tpu.pipeline_mode<synchronous>, transform_indices = @transform_2, window_bounds = array<i64: 2, 3>}, {pipeline_mode = #tpu.pipeline_mode<synchronous>, transform_indices = @transform_3, window_bounds = array<i64: 2, 256>}]} {
    %c0 = arith.constant 0 : index
    %c0_0 = arith.constant 0 : index
    %0 = vector.load %arg2[%c0, %c0_0] : memref<2x64xbf16, #tpu.memory_space<vmem>>, vector<2x64xbf16>
    %c0_1 = arith.constant 0 : index
    %c0_2 = arith.constant 0 : index
    %1 = vector.load %arg1[%c0_1, %c0_2] : memref<64x128xbf16, #tpu.memory_space<vmem>>, vector<64x128xbf16>
    %cst = arith.constant dense<0.000000e+00> : vector<2x128xf32>
    %2 = tpu.matmul %0, %1, %cst {dimension_numbers = #tpu.dot_dimension_numbers<[1], [0], [0], [1], [0, 0, 1, 1], [], []>} : vector<2x64xbf16>, vector<64x128xbf16>, vector<2x128xf32> -> vector<2x128xf32>
    %c128_i32 = arith.constant 128 : i32
    %3 = arith.muli %arg0, %c128_i32 : i32
    %4 = tpu.assume_multiple %3, 128 : i32
    %c0_3 = arith.constant 0 : index
    %5 = arith.index_cast %4 : i32 to index
    %6 = vector.load %arg4[%c0_3, %5] : memref<2x256xf32, #tpu.memory_space<vmem>>, vector<2x128xf32>
    tpu.vector_store %arg4[%c0_3, %5], %2 {strides = array<i32>} : memref<2x256xf32, #tpu.memory_space<vmem>>, vector<2x128xf32>,
    %c1_i32 = arith.constant 1 : i32
    %7 = arith.cmpi eq, %arg0, %c1_i32 : i32
    %8 = arith.extui %7 : i1 to i32
    %c0_i32 = arith.constant 0 : i32
    %9 = arith.cmpi ne, %8, %c0_i32 : i32
    scf.if %9 {
      %c0_4 = arith.constant 0 : index
      %c0_5 = arith.constant 0 : index
      %10 = vector.load %arg4[%c0_4, %c0_5] : memref<2x256xf32, #tpu.memory_space<vmem>>, vector<2x256xf32>
      %cst_6 = arith.constant dense<0.000000e+00> : vector<2xf32>
      %11 = vector.multi_reduction <add>, %10, %cst_6 [1] : vector<2x256xf32> to vector<2xf32>
      %12 = vector.shape_cast %11 : vector<2xf32> to vector<2x1xf32>
      %cst_7 = arith.constant 1.620000e+02 : f32
      %13 = vector.broadcast %cst_7 : f32 to vector<2x1xf32>
      %14 = arith.divf %12, %13 : vector<2x1xf32>
      %15 = vector.broadcast %14 : vector<2x1xf32> to vector<2x256xf32>
      %16 = arith.subf %10, %15 : vector<2x256xf32>
      %17 = arith.mulf %16, %16 : vector<2x256xf32>
      %cst_8 = arith.constant dense<0.000000e+00> : vector<2xf32>
      %18 = vector.multi_reduction <add>, %17, %cst_8 [1] : vector<2x256xf32> to vector<2xf32>
      %19 = vector.shape_cast %18 : vector<2xf32> to vector<2x1xf32>
      %cst_9 = arith.constant 9.400000e+01 : f32
      %20 = vector.broadcast %cst_9 : f32 to vector<2x1xf32>
      %21 = arith.mulf %20, %14 : vector<2x1xf32>
      %22 = arith.mulf %21, %14 : vector<2x1xf32>
      %23 = arith.subf %19, %22 : vector<2x1xf32>
      %cst_10 = arith.constant 1.620000e+02 : f32
      %24 = vector.broadcast %cst_10 : f32 to vector<2x1xf32>
      %25 = arith.divf %23, %24 : vector<2x1xf32>
      %c0_11 = arith.constant 0 : index
      %c0_12 = arith.constant 0 : index
      %26 = vector.load %arg3[%c0_11, %c0_12] : memref<2x3xf32, #tpu.memory_space<vmem>>, vector<2x1xf32>
      %c0_13 = arith.constant 0 : index
      %c1 = arith.constant 1 : index
      %27 = vector.load %arg3[%c0_13, %c1] : memref<2x3xf32, #tpu.memory_space<vmem>>, vector<2x1xf32>
      %c0_14 = arith.constant 0 : index
      %c2 = arith.constant 2 : index
      %28 = vector.load %arg3[%c0_14, %c2] : memref<2x3xf32, #tpu.memory_space<vmem>>, vector<2x1xf32>
      %29 = arith.negf %28 : vector<2x1xf32>
      %30 = math.exp %29 : vector<2x1xf32>
      %cst_15 = arith.constant 1.000000e+00 : f32
      %31 = vector.broadcast %cst_15 : f32 to vector<2x1xf32>
      %32 = arith.addf %31, %30 : vector<2x1xf32>
      %33 = arith.divf %31, %32 : vector<2x1xf32>
      %cst_16 = arith.constant 9.99999974E-5 : f32
      %34 = vector.broadcast %cst_16 : f32 to vector<2x1xf32>
      %35 = arith.addf %25, %34 : vector<2x1xf32>
      %36 = math.rsqrt %35 : vector<2x1xf32>
      %37 = arith.mulf %26, %36 : vector<2x1xf32>
      %38 = arith.mulf %14, %37 : vector<2x1xf32>
      %39 = arith.subf %27, %38 : vector<2x1xf32>
      %40 = vector.broadcast %37 : vector<2x1xf32> to vector<2x256xf32>
      %41 = arith.mulf %10, %40 : vector<2x256xf32>
      %42 = vector.broadcast %39 : vector<2x1xf32> to vector<2x256xf32>
      %43 = arith.addf %41, %42 : vector<2x256xf32>
      %44 = arith.negf %43 : vector<2x256xf32>
      %45 = math.exp %44 : vector<2x256xf32>
      %cst_17 = arith.constant 1.000000e+00 : f32
      %46 = vector.broadcast %cst_17 : f32 to vector<2x256xf32>
      %47 = arith.addf %46, %45 : vector<2x256xf32>
      %48 = arith.divf %46, %47 : vector<2x256xf32>
      %49 = vector.broadcast %33 : vector<2x1xf32> to vector<2x256xf32>
      %50 = arith.mulf %48, %49 : vector<2x256xf32>
      %c0_18 = arith.constant 0 : index
      %c0_19 = arith.constant 0 : index
      %51 = vector.load %arg4[%c0_18, %c0_19] : memref<2x256xf32, #tpu.memory_space<vmem>>, vector<2x256xf32>
      tpu.vector_store %arg4[%c0_18, %c0_19], %50 {strides = array<i32>} : memref<2x256xf32, #tpu.memory_space<vmem>>, vector<2x256xf32>,
    } else {
    }
    return
  }
  func.func @transform_0(%arg0: i32) -> (i32, i32) {
    %c0_i32 = arith.constant 0 : i32
    %c0_i32_0 = arith.constant 0 : i32
    return %c0_i32, %arg0 : i32, i32
  }
  func.func @transform_1(%arg0: i32) -> (i32, i32) {
    %c0_i32 = arith.constant 0 : i32
    %c0_i32_0 = arith.constant 0 : i32
    %c0_i32_1 = arith.constant 0 : i32
    return %c0_i32, %c0_i32_0 : i32, i32
  }
  func.func @transform_2(%arg0: i32) -> (i32, i32) {
    %c0_i32 = arith.constant 0 : i32
    %c0_i32_0 = arith.constant 0 : i32
    %c0_i32_1 = arith.constant 0 : i32
    return %c0_i32, %c0_i32_0 : i32, i32
  }
  func.func @transform_3(%arg0: i32) -> (i32, i32) {
    %c0_i32 = arith.constant 0 : i32
    %c0_i32_0 = arith.constant 0 : i32
    %c0_i32_1 = arith.constant 0 : i32
    return %c0_i32, %c0_i32_0 : i32, i32
  }
}

</mosaic_0001>

<llo_original>
// kernel: tpu_custom_call.1
$region0: #{tpu_custom_call.1}
  #allocation0 [shape = 'u32[]', space=smem, size = 0x4, offset = 0x4, fixed_abs, tag = 'smem constant byte address 0x4 - core index']
  #allocation1 [shape = 'u32[144,128]{1,0:T(1,128)}', space=vmem, size = 0x12000, scoped, tag = 'internal scratch']
  %s0 = inlined_call_operand.hbm [shape: bf16[64,256], index: 0, kind: input, shape index: {}]
  %s1 = inlined_call_operand.vmem [shape: bf16[2,64], index: 1, kind: input, shape index: {}]
  %s2 = inlined_call_operand.vmem [shape: f32[2,3], index: 2, kind: input, shape index: {}]
  %s3 = inlined_call_operand.hbm [shape: f32[2,256], index: 3, kind: output, shape index: {}]
  %s4 = sld [smem:[#allocation0]]
  $region53: #{tpu_custom_call.1} parent=0
    _
  %s6 = ssub.s32 1, %s4
  %s7 = scalar_select 0, %s6, %s4
  $region1: #{tpu_custom_call.1} parent=0
    #allocation2 [shape = 'u8[32768]{0}', space=vmem, size = 0x8000, scoped, tag = 'input window, operand 0']
    #allocation3 [shape = 's32[2]{0}', space=sflag, size = 0x8, scoped, tag = 'scoped memory for tpu_custom_call.1']
    #allocation4 [shape = 's32[2]{0}', space=sflag, size = 0x8, scoped, tag = 'scoped memory for tpu_custom_call.1']
    #allocation5 [shape = 'u8[2048]{0}', space=vmem, size = 0x800, scoped, tag = 'output window, operand 0, single buffered']
    %8 = vsyncpa [#allocation3], 0
    %s9 = scalar_lea.sflag [#allocation3], 1
    %10 = vsyncpa %s9, 0
    %11 = vsyncpa [#allocation4], 0
    loop: start=0, step=1, limit=4
    $region2: #{tpu_custom_call.1} parent=1 // loop_pre_header
      _
    $region3: #{tpu_custom_call.1} parent=1 // loop_header
      %s13 = sphi 0, %s17
      %p14 = scmp.ge.s32.totalorder %s13, 4
      %s23 = sphi 0, %s25
      %s26 = sphi 0, %s23
      %s27 = sphi 0, %s26
      %s43 = sphi 0, %s27
      %s47 = sphi 0, %s47
      %s49 = sphi 0, %s47
      %s50 = sphi 0, %s49
      %s64 = sphi 0, %s50
      %s68 = sphi 0, %s68
      %s70 = sphi 0, %s68
      %s71 = sphi 0, %s70
      %s85 = sphi 0, %s71
      %s89 = sphi 0, %s89
      %s91 = sphi 0, %s89
      %s92 = sphi 0, %s91
      %s106 = sphi 0, %s92
    $region4: #{tpu_custom_call.1} parent=1 // loop_header_branch
      %16 = sbr.rel (%p14) target = $region8
    $region5: #{tpu_custom_call.1} parent=1 // loop_body
      %s18 = ssub.s32 %s13, 1
      %s19 = ssub.s32 %s13, 2
      %s20 = sadd.s32 %s13, 1
      %s21 = ssub.s32 %s13, %s20
      %p22 = scmp.eq.s32.totalorder %s21, 0
      %s24 = sadd.s32 %s23, 1
      %s25 = scalar_select %p22, %s23, %s24
      %p28 = pneg %p22
      %p29 = scmp.eq.s32.totalorder %s13, 1
      %p30 = por %p28, %p29
      %p31 = scmp.ne.s32.totalorder %s23, %s26
      %p32 = scmp.eq.s32.totalorder %s13, 0
      %p33 = por %p31, %p32
      %p34 = scmp.ne.s32.totalorder %s23, %s26
      %p35 = scmp.eq.s32.totalorder %s18, 1
      %p36 = por %p34, %p35
      %p37 = scmp.ne.s32.totalorder %s26, %s27
      %p38 = scmp.eq.s32.totalorder %s18, 0
      %p39 = por %p37, %p38
      %p40 = scmp.ne.s32.totalorder %s26, %s27
      %p41 = scmp.eq.s32.totalorder %s19, 1
      %p42 = por %p40, %p41
      %p44 = scmp.ne.s32.totalorder %s27, %s43
      %p45 = scmp.eq.s32.totalorder %s19, 0
      %p46 = por %p44, %p45
      %s48 = sadd.s32 %s47, 1
      %p51 = scmp.eq.s32.totalorder %s13, 1
      %p52 = scmp.ne.s32.totalorder %s47, %s49
      %p53 = scmp.eq.s32.totalorder %s13, 0
      %p54 = por %p52, %p53
      %p55 = scmp.ne.s32.totalorder %s47, %s49
      %p56 = scmp.eq.s32.totalorder %s18, 1
      %p57 = por %p55, %p56
      %p58 = scmp.ne.s32.totalorder %s49, %s50
      %p59 = scmp.eq.s32.totalorder %s18, 0
      %p60 = por %p58, %p59
      %p61 = scmp.ne.s32.totalorder %s49, %s50
      %p62 = scmp.eq.s32.totalorder %s19, 1
      %p63 = por %p61, %p62
      %p65 = scmp.ne.s32.totalorder %s50, %s64
      %p66 = scmp.eq.s32.totalorder %s19, 0
      %p67 = por %p65, %p66
      %s69 = sadd.s32 %s68, 1
      %p72 = scmp.eq.s32.totalorder %s13, 1
      %p73 = scmp.ne.s32.totalorder %s68, %s70
      %p74 = scmp.eq.s32.totalorder %s13, 0
      %p75 = por %p73, %p74
      %p76 = scmp.ne.s32.totalorder %s68, %s70
      %p77 = scmp.eq.s32.totalorder %s18, 1
      %p78 = por %p76, %p77
      %p79 = scmp.ne.s32.totalorder %s70, %s71
      %p80 = scmp.eq.s32.totalorder %s18, 0
      %p81 = por %p79, %p80
      %p82 = scmp.ne.s32.totalorder %s70, %s71
      %p83 = scmp.eq.s32.totalorder %s19, 1
      %p84 = por %p82, %p83
      %p86 = scmp.ne.s32.totalorder %s71, %s85
      %p87 = scmp.eq.s32.totalorder %s19, 0
      %p88 = por %p86, %p87
      %s90 = sadd.s32 %s89, 1
      %p93 = scmp.eq.s32.totalorder %s13, 1
      %p94 = scmp.ne.s32.totalorder %s89, %s91
      %p95 = scmp.eq.s32.totalorder %s13, 0
      %p96 = por %p94, %p95
      %p97 = scmp.ne.s32.totalorder %s89, %s91
      %p98 = scmp.eq.s32.totalorder %s18, 1
      %p99 = por %p97, %p98
      %p100 = scmp.ne.s32.totalorder %s91, %s92
      %p101 = scmp.eq.s32.totalorder %s18, 0
      %p102 = por %p100, %p101
      %p103 = scmp.ne.s32.totalorder %s91, %s92
      %p104 = scmp.eq.s32.totalorder %s19, 1
      %p105 = por %p103, %p104
      %p107 = scmp.ne.s32.totalorder %s92, %s106
      %p108 = scmp.eq.s32.totalorder %s19, 0
      %p109 = por %p107, %p108
      %p110 = scmp.le.s32.totalorder 1, %s13
      %p111 = scmp.lt.s32.totalorder %s13, 3
      %p112 = pnand %p110, %p111
      %p113 = pneg %p112
      // Predicated region
      $region9: #{tpu_custom_call.1} parent=5 // pred_check
        _
      $region10: #{tpu_custom_call.1} parent=5 // pred_check_branch
        %115 = sbr.rel (%p112) target = $region12
      $region11: #{tpu_custom_call.1} parent=5 // pred_region
        %s116 = ssub.s32 %s13, 1
        // Predicated region
        $region13: #{tpu_custom_call.1} parent=11 // pred_check
          %p117 = pneg %p60
        $region14: #{tpu_custom_call.1} parent=11 // pred_check_branch
          %119 = sbr.rel (%p117) target = $region16
        $region15: #{tpu_custom_call.1} parent=11 // pred_region
          _
        $region16: #{tpu_custom_call.1} parent=11 // pred_fallthru
          _
        // Predicated region
        $region17: #{tpu_custom_call.1} parent=11 // pred_check
          %p120 = pneg %p81
        $region18: #{tpu_custom_call.1} parent=11 // pred_check_branch
          %122 = sbr.rel (%p120) target = $region20
        $region19: #{tpu_custom_call.1} parent=11 // pred_region
          _
        $region20: #{tpu_custom_call.1} parent=11 // pred_fallthru
          _
      $region12: #{tpu_custom_call.1} parent=5 // pred_fallthru
        _
      %p123 = scmp.lt.s32.totalorder %s13, 2
      // Predicated region
      $region21: #{tpu_custom_call.1} parent=5 // pred_check
        %p124 = pneg %p123
      $region22: #{tpu_custom_call.1} parent=5 // pred_check_branch
        %126 = sbr.rel (%p124) target = $region24
      $region23: #{tpu_custom_call.1} parent=5 // pred_region
        // Predicated region
        $region25: #{tpu_custom_call.1} parent=23 // pred_check
          %p127 = pneg %p33
        $region26: #{tpu_custom_call.1} parent=23 // pred_check_branch
          %129 = sbr.rel (%p127) target = $region28
        $region27: #{tpu_custom_call.1} parent=23 // pred_region
          %s130 = sand.u32 %s23, 1
          %s131 = scalar_lea.sflag [#allocation3], %s130
          %s132 = sand.u32 %s23, 1
          %s133 = smul.addr %s132, 32
          %s134 = scalar_lea.vmem [#allocation2], %s133
          %s136 = ssub.s32 512, 512
          %137 = vsyncadd %s131, %s136
          %s138 = smul.addr %s13, 64
          %s139 = scalar_lea.hbm %s0, %s138
          %s140 = sshll.u32 %s134, 4
          %s141 = int_to_ptr.vmem [resolvable:$true] %s140
          %146 = dma.hbm_to_vmem [thread:$0]  %s139, 512, %s141, %s131, 128, 64, 4
        $region28: #{tpu_custom_call.1} parent=23 // pred_fallthru
          _
      $region24: #{tpu_custom_call.1} parent=5 // pred_fallthru
        _
      %p147 = scmp.le.s32.totalorder 1, %s13
      %p148 = scmp.lt.s32.totalorder %s13, 3
      %p149 = pnand %p147, %p148
      %p150 = pneg %p149
      // Predicated region
      $region29: #{tpu_custom_call.1} parent=5 // pred_check
        _
      $region30: #{tpu_custom_call.1} parent=5 // pred_check_branch
        %152 = sbr.rel (%p149) target = $region32
      $region31: #{tpu_custom_call.1} parent=5 // pred_region
        %s153 = ssub.s32 %s13, 1
        %s154 = sand.u32 %s26, 1
        %s155 = scalar_lea.sflag [#allocation3], %s154
        %s156 = sand.u32 %s26, 1
        %s157 = smul.addr %s156, 32
        %s158 = scalar_lea.vmem [#allocation2], %s157
        // Predicated region
        $region33: #{tpu_custom_call.1} parent=31 // pred_check
          %p159 = pneg %p39
        $region34: #{tpu_custom_call.1} parent=31 // pred_check_branch
          %161 = sbr.rel (%p159) target = $region36
        $region35: #{tpu_custom_call.1} parent=31 // pred_region
          %162 = dma.done %s155, 512
        $region36: #{tpu_custom_call.1} parent=31 // pred_fallthru
          _
        %s163 = sand.u32 %s26, 1
        %s164 = scalar_lea.sflag [#allocation3], %s163
        %s165 = sand.u32 %s26, 1
        %s166 = smul.addr %s165, 32
        %s167 = scalar_lea.vmem [#allocation2], %s166
        %p168 = pneg %p39
        %p169 = pneg %p36
        %p170 = pneg %p60
        %p171 = pneg %p57
        %p172 = pneg %p81
        %p173 = pneg %p78
        %p174 = pneg %p102
        %p175 = pneg %p99
        %v177 = vld [vmem:[%s1] sm:$0x1]
        %v178 = vld [vmem:[%s158] sm:$0xf]
        %v179 = vld [vmem:[%s158 + $0x4] sm:$0xf]
        %v180 = vld [vmem:[%s158 + $0x8] sm:$0xf]
        %v181 = vld [vmem:[%s158 + $0xc] sm:$0xf]
        %v182 = vld [vmem:[%s158 + $0x10] sm:$0xf]
        %v183 = vld [vmem:[%s158 + $0x14] sm:$0xf]
        %v184 = vld [vmem:[%s158 + $0x18] sm:$0xf]
        %v185 = vld [vmem:[%s158 + $0x1c] sm:$0xf]
        %v194 = vunpack.c.l.b16 %v178
        %v195 = vunpack.c.l.b16 %v179
        %v196 = vunpack.c.l.b16 %v180
        %v197 = vunpack.c.l.b16 %v181
        %v198 = vunpack.c.l.b16 %v182
        %v199 = vunpack.c.l.b16 %v183
        %v200 = vunpack.c.l.b16 %v184
        %v201 = vunpack.c.l.b16 %v185
        %v202 = vpack.c.b16 %v195, %v194
        %v203 = vpack.c.b16 %v197, %v196
        %v204 = vpack.c.b16 %v199, %v198
        %v205 = vpack.c.b16 %v201, %v200
        %vm210 = vcmask 523264
        %v212 = vsel %vm210, %v177, 0
        %214 = vmatprep.subr.bf16.mxu0 0
        %215 = vmatpush1.bf16.msra.mxu0 %v202
        %216 = vmatprep.subr.bf16.mxu0 0
        %217 = vmatpush1.bf16.msra.mxu0 %v203
        %218 = vmatprep.subr.bf16.mxu0 0
        %219 = vmatpush1.bf16.msra.mxu0 %v204
        %220 = vmatprep.subr.bf16.mxu0 0
        %221 = vmatpush1.bf16.msra.mxu0 %v205
        %222 = vmatprep.subr.bf16.mxu0 0
        %223 = vmatpush1.bf16.msra.mxu0 0
        %224 = vmatprep.subr.bf16.mxu0 0
        %225 = vmatpush1.bf16.msra.mxu0 0
        %226 = vmatprep.subr.bf16.mxu0 0
        %227 = vmatpush1.bf16.msra.mxu0 0
        %228 = vmatprep.subr.bf16.mxu0 0
        %229 = vmatpush1.bf16.msra.mxu0 0
        %230 = vmatprep.subr.bf16.mxu0 0
        %231 = vmatpush1.bf16.msra.mxu0 0
        %232 = vmatprep.subr.bf16.mxu0 0
        %233 = vmatpush1.bf16.msra.mxu0 0
        %234 = vmatprep.subr.bf16.mxu0 0
        %235 = vmatpush1.bf16.msra.mxu0 0
        %236 = vmatprep.subr.bf16.mxu0 0
        %237 = vmatpush1.bf16.msra.mxu0 0
        %238 = vmatprep.subr.bf16.mxu0 0
        %239 = vmatpush1.bf16.msra.mxu0 0
        %240 = vmatprep.subr.bf16.mxu0 0
        %241 = vmatpush1.bf16.msra.mxu0 0
        %242 = vmatprep.subr.bf16.mxu0 0
        %243 = vmatpush1.bf16.msra.mxu0 0
        %244 = vmatprep.subr.bf16.mxu0 0
        %245 = vmatpush1.bf16.msra.mxu0 0
        %246 = vmatprep.mubr.bf16.mxu0 0
        %247 = vmatmul.mubr.bf16.gmra.mrb[0].mxu0 %v212
        %v248 = vpop.f32.mrb[0].mxu0
        %v249 = vadd.f32 0.0, %v248
        %v250 = vpop.f32.mrb[0].mxu0
        %v251 = vpop.f32.mrb[0].mxu0
        %v252 = vpop.f32.mrb[0].mxu0
        %253 = vdwg.mxu0
        %s254 = smul.u32 %s18, 128
        %s255 = sshra.s32 %s254, 7
        %s256 = sand.u32 %s254, 127
        %s257 = smul.addr %s255, 2
        %s258 = scalar_lea.vmem [#allocation5], %s257
        %259 = vst [vmem:[%s258] sm:$0x3] %v249
        %p260 = scmp.eq.s32.totalorder %s18, 1
        // Predicated region
        $region37: #{tpu_custom_call.1} parent=31 // pred_check
          %p261 = pneg %p260
        $region38: #{tpu_custom_call.1} parent=31 // pred_check_branch
          %263 = sbr.rel (%p261) target = $region40
        $region39: #{tpu_custom_call.1} parent=31 // pred_region
          %v264 = vld [vmem:[#allocation5] sm:$0xf]
          %v267 = vunpack.c.l.s4 1983009808
          %v268 = vunpack.c.0.s8 %v267
          %v269 = vlaneseq
          %v270 = vshrl.u32 %v269, 7
          %v271 = vsub.s32 %v268, %v270
          %v272 = vrot.slane %v264, %v271
          %v273 = vcombine.high %v272, %v272
          %vm276 = vcmask 1041408
          %v277 = vsel %vm276, %v272, 0.0
          %v278 = vsel %vm276, %v273, 0.0
          %v279 = vadd.f32 %v277, %v278
          %280 = vadd.xlane.f32.xlu0 %v279
          %v281 = vpop.xlane.xlu0 %280
          %v282 = vrcp.pop 162.0
          %v283 = vmul.f32 %v281, %v282
          %v286 = vunpack.c.l.s4 269488144
          %v287 = vunpack.c.0.s8 %v286
          %v288 = vlaneseq
          %v289 = vshrl.u32 %v288, 7
          %v290 = vsub.s32 %v287, %v289
          %v291 = vrot.slane %v283, %v290
          %v293 = vsub.f32 %v264, %v291
          %v294 = vmul.f32 %v293, %v293
          %v297 = vunpack.c.l.s4 1983009808
          %v298 = vunpack.c.0.s8 %v297
          %v299 = vlaneseq
          %v300 = vshrl.u32 %v299, 7
          %v301 = vsub.s32 %v298, %v300
          %v302 = vrot.slane %v294, %v301
          %v303 = vcombine.high %v302, %v302
          %v306 = vsel %vm276, %v302, 0.0
          %v307 = vsel %vm276, %v303, 0.0
          %v308 = vadd.f32 %v306, %v307
          %309 = vadd.xlane.f32.xlu0 %v308
          %v310 = vpop.xlane.xlu0 %309
          %v311 = vmul.f32 %v283, 94.0
          %v312 = vmul.f32 %v311, %v283
          %v313 = vsub.f32 %v310, %v312
          %v314 = vmul.f32 %v313, %v282
          %v315 = vld [vmem:[%s2] sm:$0x3]
          %v316 = vxor.u32 %v315, 2147483648
          %v317 = vmul.f32 %v316, 1.442695
          %v318 = vpow.pop %v317
          %v319 = vadd.f32 %v318, 1.0
          %v320 = vrcp.pop %v319
          %v321 = vmul.f32 1.0, %v320
          %v322 = vadd.f32 %v314, 0.0001
          %v323 = vrsqrt.pop %v322
          %v324 = vmul.f32 %v315, %v323
          %v325 = vmul.f32 %v283, %v324
          %327 = vrot.lane.b32.xlu0 %v325, 1
          %v328 = vpop.permute.xlu0 %327
          %v330 = vsub.f32 %v315, %v328
          %332 = vset.pattern.permute.xlu0 0
          %333 = vperm.xlu0 %332, %v324
          %v334 = vpop.permute.xlu0 %333
          %v336 = vunpack.c.l.s4 269488144
          %v337 = vunpack.c.0.s8 %v336
          %v338 = vlaneseq
          %v339 = vshrl.u32 %v338, 7
          %v340 = vsub.s32 %v337, %v339
          %v341 = vrot.slane %v334, %v340
          %v343 = vmul.f32 %v264, %v341
          %345 = vset.pattern.permute.xlu0 1
          %346 = vperm.xlu0 %345, %v330
          %v347 = vpop.permute.xlu0 %346
          %v349 = vunpack.c.l.s4 269488144
          %v350 = vunpack.c.0.s8 %v349
          %v351 = vlaneseq
          %v352 = vshrl.u32 %v351, 7
          %v353 = vsub.s32 %v350, %v352
          %v354 = vrot.slane %v347, %v353
          %v356 = vadd.f32 %v343, %v354
          %v357 = vxor.u32 %v356, 2147483648
          %v358 = vmul.f32 %v357, 1.442695
          %v359 = vpow.pop %v358
          %v360 = vadd.f32 %v359, 1.0
          %v361 = vrcp.pop %v360
          %v362 = vmul.f32 1.0, %v361
          %364 = vset.pattern.permute.xlu0 2
          %365 = vperm.xlu0 %364, %v321
          %v366 = vpop.permute.xlu0 %365
          %v368 = vunpack.c.l.s4 269488144
          %v369 = vunpack.c.0.s8 %v368
          %v370 = vlaneseq
          %v371 = vshrl.u32 %v370, 7
          %v372 = vsub.s32 %v369, %v371
          %v373 = vrot.slane %v366, %v372
          %v375 = vmul.f32 %v362, %v373
          %376 = vst [vmem:[#allocation5] sm:$0xf] %v375
        $region40: #{tpu_custom_call.1} parent=31 // pred_fallthru
          _
        // Predicated region
        $region41: #{tpu_custom_call.1} parent=31 // pred_check
          %p377 = pneg %p99
        $region42: #{tpu_custom_call.1} parent=31 // pred_check_branch
          %379 = sbr.rel (%p377) target = $region44
        $region43: #{tpu_custom_call.1} parent=31 // pred_region
          %s381 = ssub.s32 64, 64
          %382 = vsyncadd [#allocation4], %s381
          %s384 = sshll.u32 [#allocation5], 4
          %s385 = int_to_ptr.vmem [resolvable:$true] %s384
          %387 = dma.vmem_to_hbm [thread:$0]  %s385, 64, %s3, [#allocation4]
        $region44: #{tpu_custom_call.1} parent=31 // pred_fallthru
          _
        // Predicated region
        $region45: #{tpu_custom_call.1} parent=31 // pred_check
          %p388 = pneg %p99
        $region46: #{tpu_custom_call.1} parent=31 // pred_check_branch
          %390 = sbr.rel (%p388) target = $region48
        $region47: #{tpu_custom_call.1} parent=31 // pred_region
          %391 = dma.done [#allocation4], 64
        $region48: #{tpu_custom_call.1} parent=31 // pred_fallthru
          _
      $region32: #{tpu_custom_call.1} parent=5 // pred_fallthru
        _
      %p392 = scmp.le.s32.totalorder 2, %s13
      // Predicated region
      $region49: #{tpu_custom_call.1} parent=5 // pred_check
        %p393 = pneg %p392
      $region50: #{tpu_custom_call.1} parent=5 // pred_check_branch
        %395 = sbr.rel (%p393) target = $region52
      $region51: #{tpu_custom_call.1} parent=5 // pred_region
        %s396 = ssub.s32 %s13, 2
      $region52: #{tpu_custom_call.1} parent=5 // pred_fallthru
        _
    $region6: #{tpu_custom_call.1} parent=1 // loop_footer
      %s17 = sadd.s32 1, %s13
    $region7: #{tpu_custom_call.1} parent=1 // loop_footer_branch
      %12 = sbr.rel target = $region3
    $region8: #{tpu_custom_call.1} parent=1 // loop_exit
      _
    %397 = vsyncpa [#allocation3], 1
    %s398 = scalar_lea.sflag [#allocation3], 1
    %399 = vsyncpa %s398, 1
    %400 = vsyncpa [#allocation4], 1
    %s401 = scalar_lea.sflag [#allocation4], 1
    %402 = vsyncpa %s401, 1

</llo_original>
